<compile_context>
chip_gen: v7x
topology: tpu7x:2x2x1
jax: 0.10.0
libtpu: 0.0.40
codegen_flags: <defaults>
</compile_context>

<pallas_src>
import jax
import jax.numpy as jnp
from jax.experimental import pallas as pl
from jax.experimental.pallas import tpu as pltpu


# ----------------------------------------------------------------------------
# Kernel
# ----------------------------------------------------------------------------
def _critic_kernel(x_ref, wh_ref, bh_ref, wv_ref, bv_ref, out_ref):
    # hidden = relu(x @ Wh + bh)                         -> (tb, Hp), f32 accum
    h = jnp.dot(x_ref[...], wh_ref[...], preferred_element_type=jnp.float32)
    h = jnp.maximum(h + bh_ref[...], 0.0)
    # fused value heads: (tb, Hp) @ (Hp, 2) -> (tb, 2)   (no transpose of h)
    v = jnp.dot(h, wv_ref[...], preferred_element_type=jnp.float32)
    out_ref[...] = (v + bv_ref[...]).astype(out_ref.dtype)


# ----------------------------------------------------------------------------
# One-time parameter preparation (outside the per-step hot path)
# ----------------------------------------------------------------------------
def prepare_params(params, *, compute_dtype=None):
    """Pad the hidden dim to a lane multiple, fuse the two 1-wide heads, and
    optionally pre-cast the hidden weight to a lower compute dtype.  Call this
    ONCE per parameter update, not on every forward."""
    wh, bh = params["wh"], params["bh"]
    we, be, wi, bi = params["we"], params["be"], params["wi"], params["bi"]
    H = wh.shape[1]
    Hp = ((H + 127) // 128) * 128
    if Hp != H:  # zero-padding is an exact no-op through ReLU and zero head rows
        wh = jnp.pad(wh, ((0, 0), (0, Hp - H)))
        bh = jnp.pad(bh, ((0, 0), (0, Hp - H)))
        we = jnp.pad(we, ((0, Hp - H), (0, 0)))
        wi = jnp.pad(wi, ((0, Hp - H), (0, 0)))
    wv = jnp.concatenate([we, wi], axis=1)           # (Hp, 2) fused head weight
    bv = jnp.concatenate([be, bi], axis=1)           # (1, 2)  fused head bias
    if compute_dtype is not None:
        wh = wh.astype(compute_dtype)                # heads/biases stay f32
    return {"wh": wh, "bh": bh, "wv": wv, "bv": bv}


# ----------------------------------------------------------------------------
# Tiling / specs
# ----------------------------------------------------------------------------
def _vmem_capacity_bytes():
    # Hardware query only — a failure here never masks kernel errors.
    try:
        return int(pltpu.get_tpu_info().vmem_capacity_bytes)
    except Exception:
        return 64 * 1024 * 1024        # conservative default (v7x per-TC VMEM)


def _pick_tile_b(B, F, Hp, x_bytes, w_bytes, tile_b):
    """Largest lane-aligned batch tile that fits ~half of this chip's VMEM,
    accounting for double-buffered x/out blocks, 2x weight blocks and the
    compiler-managed (tb, Hp) f32 hidden scratch.  No forced multi-step split
    (single-TC v5e/v6e lose bandwidth from smaller tiles)."""
    if tile_b is not None:
        tb = int(tile_b)
    else:
        budget = _vmem_capacity_bytes() // 2          # ~32 MiB v7x, ~64 MiB v5e/v6e
        resident = 2 * (F * Hp * w_bytes + Hp * 4 + Hp * 2 * 4 + 2 * 4)
        per_row = 2 * F * x_bytes + Hp * 4 + 2 * 2 * 4
        tb = (budget - resident) // max(per_row, 1)
    if tb >= B:
        return B                                      # full-batch block (full-dim rule)
    tb = min(tb, 1024)                                # HBM-roofline plateau
    return max(128, (tb // 128) * 128)                # lane/sublane aligned tile
    # TODO(synk): if the (F, Hp) weight slab alone exceeds the VMEM budget
    # (very large F*H), add a K-grid axis over F with an f32 accumulator (P3).


def _build_specs(F, Hp, tb):
    in_specs = [
        pl.BlockSpec((tb, F), lambda i: (i, 0)),      # x tile (batch-tiled, pipelined)
        pl.BlockSpec((F, Hp), lambda i: (0, 0)),      # hidden weight (in, hidden)
        pl.BlockSpec((1, Hp), lambda i: (0, 0)),      # hidden bias
        pl.BlockSpec((Hp, 2), lambda i: (0, 0)),      # fused head weights
        pl.BlockSpec((1, 2), lambda i: (0, 0)),       # fused head biases
    ]
    out_spec = pl.BlockSpec((tb, 2), lambda i: (i, 0))
    return in_specs, out_spec


# ----------------------------------------------------------------------------
# Forward
# ----------------------------------------------------------------------------
def model_critic_forward(x, prepared, *, tile_b=None, core_parallel=False,
                         split=True):
    """x: (B, inputs_count).  `prepared` comes from prepare_params().
    Returns (ext_value, int_value) as two (B, 1) arrays (split=True, matching
    the PyTorch module) or the fused (B, 2) array (split=False)."""
    wh, bh, wv, bv = prepared["wh"], prepared["bh"], prepared["wv"], prepared["bv"]
    B, F = x.shape
    Fw, Hp = wh.shape
    assert F == Fw, "x feature dim must match prepared hidden weight"

    x_bytes = jnp.dtype(x.dtype).itemsize
    w_bytes = jnp.dtype(wh.dtype).itemsize
    tb = _pick_tile_b(B, F, Hp, x_bytes, w_bytes, tile_b)
    grid = (pl.cdiv(B, tb),)

    # core_parallel=True shards the batch axis across the two v7x TensorCores;
    # plain "parallel" is fine on single-TC v5e/v6e.
    semantics = (pltpu.CORE_PARALLEL,) if core_parallel else ("parallel",)
    vmem_cap = _vmem_capacity_bytes()
    cparams = pltpu.CompilerParams(
        dimension_semantics=semantics,
        vmem_limit_bytes=int(vmem_cap * 0.8))

    weight_bytes = F * Hp * w_bytes + Hp * 4 + Hp * 2 * 4 + 2 * 4
    cost = pl.CostEstimate(
        flops=2 * B * F * Hp + 2 * B * Hp * 2 + 2 * B * Hp,
        transcendentals=0,
        bytes_accessed=B * F * x_bytes + weight_bytes + B * 2 * 4)

    in_specs, out_spec = _build_specs(F, Hp, tb)
    out = pl.pallas_call(
        _critic_kernel,
        out_shape=jax.ShapeDtypeStruct((B, 2), jnp.float32),
        grid_spec=pltpu.PrefetchScalarGridSpec(
            num_scalar_prefetch=0,
            grid=grid,
            in_specs=in_specs,
            out_specs=out_spec),
        compiler_params=cparams,
        cost_estimate=cost,
    )(x, wh, bh, wv, bv)

    if split:
        return out[:, 0:1], out[:, 1:2]
    return out


# ----------------------------------------------------------------------------
# Init (matches the PyTorch __init__ gains) and pure-JAX reference
# ----------------------------------------------------------------------------
def init_params(key, inputs_count, hidden_count):
    k1, k2, k3 = jax.random.split(key, 3)
    ortho = jax.nn.initializers.orthogonal
    # PyTorch Linear weight is (out, in); we store (in, out).
    wh = ortho(0.1)(k1, (hidden_count, inputs_count), jnp.float32).T
    we = ortho(0.01)(k2, (1, hidden_count), jnp.float32).T
    wi = ortho(0.01)(k3, (1, hidden_count), jnp.float32).T
    return {
        "wh": wh,
        "bh": jnp.zeros((1, hidden_count), jnp.float32),
        "we": we,
        "be": jnp.zeros((1, 1), jnp.float32),
        "wi": wi,
        "bi": jnp.zeros((1, 1), jnp.float32),
    }


def _reference(x, p):
    h = jnp.maximum(x @ p["wh"] + p["bh"], 0.0)
    return h @ p["we"] + p["be"], h @ p["wi"] + p["bi"]


if __name__ == "__main__":
    inputs_count, hidden_count, batch = 32, 32, 4

    key = jax.random.PRNGKey(0)
    kx, kp = jax.random.split(key)
    x = jax.random.normal(kx, (batch, inputs_count), jnp.float32)
    params = init_params(kp, inputs_count, hidden_count)

    # One-time parameter prep (outside the per-step hot path).
    prepared = prepare_params(params)

    ext_v, int_v = model_critic_forward(x, prepared)
    jax.block_until_ready((ext_v, int_v))

    ext_ref, int_ref = _reference(x, params)
    assert ext_v.shape == (batch, 1) and int_v.shape == (batch, 1)
    assert jnp.allclose(ext_v, ext_ref, atol=1e-5, rtol=1e-5)
    assert jnp.allclose(int_v, int_ref, atol=1e-5, rtol=1e-5)

    # Fused-output path: no per-call transpose/slice ops; caller indexes.
    fused = model_critic_forward(x, prepared, split=False)
    jax.block_until_ready(fused)
    assert fused.shape == (batch, 2)
    assert jnp.allclose(fused[:, 0:1], ext_ref, atol=1e-5, rtol=1e-5)
    assert jnp.allclose(fused[:, 1:2], int_ref, atol=1e-5, rtol=1e-5)

    # bf16 path: params pre-cast ONCE; x would arrive bf16 from the upstream
    # producer (the cast here is only a stand-in for that).
    prepared_bf16 = prepare_params(params, compute_dtype=jnp.bfloat16)
    x_bf16 = x.astype(jnp.bfloat16)
    ext_b, int_b = model_critic_forward(x_bf16, prepared_bf16)
    jax.block_until_ready((ext_b, int_b))
    assert jnp.allclose(ext_b, ext_ref, atol=1e-3, rtol=5e-2)
    assert jnp.allclose(int_b, int_ref, atol=1e-3, rtol=5e-2)

    print("KERNEL_OK")
</pallas_src>

<mosaic_0001>
module attributes {stable_mosaic.version = 11 : i64} {
  func.func @_critic_kernel(%arg0: i32, %arg1: memref<4x32xf32, #tpu.memory_space<vmem>>, %arg2: memref<32x128xf32, #tpu.memory_space<vmem>>, %arg3: memref<1x128xf32, #tpu.memory_space<vmem>>, %arg4: memref<128x2xf32, #tpu.memory_space<vmem>>, %arg5: memref<1x2xf32, #tpu.memory_space<vmem>>, %arg6: memref<4x2xf32, #tpu.memory_space<vmem>>) attributes {dimension_semantics = [#tpu.dimension_semantics<parallel>], iteration_bounds = array<i64: 1>, scalar_prefetch = 0 : i64, scratch_operands = 0 : i64, tpu.core_type = #tpu.core_type<tc>, window_params = [{transform_indices = @transform_0, window_bounds = array<i64: 4, 32>}, {pipeline_mode = #tpu.pipeline_mode<synchronous>, transform_indices = @transform_1, window_bounds = array<i64: 32, 128>}, {pipeline_mode = #tpu.pipeline_mode<synchronous>, transform_indices = @transform_2, window_bounds = array<i64: 1, 128>}, {pipeline_mode = #tpu.pipeline_mode<synchronous>, transform_indices = @transform_3, window_bounds = array<i64: 128, 2>}, {pipeline_mode = #tpu.pipeline_mode<synchronous>, transform_indices = @transform_4, window_bounds = array<i64: 1, 2>}, {transform_indices = @transform_5, window_bounds = array<i64: 4, 2>}]} {
    %c0 = arith.constant 0 : index
    %c0_0 = arith.constant 0 : index
    %0 = vector.load %arg1[%c0, %c0_0] : memref<4x32xf32, #tpu.memory_space<vmem>>, vector<4x32xf32>
    %c0_1 = arith.constant 0 : index
    %c0_2 = arith.constant 0 : index
    %1 = vector.load %arg2[%c0_1, %c0_2] : memref<32x128xf32, #tpu.memory_space<vmem>>, vector<32x128xf32>
    %cst = arith.constant dense<0.000000e+00> : vector<4x128xf32>
    %2 = tpu.matmul %0, %1, %cst {dimension_numbers = #tpu.dot_dimension_numbers<[1], [0], [0], [1], [0, 0, 1, 1], [], []>} : vector<4x32xf32>, vector<32x128xf32>, vector<4x128xf32> -> vector<4x128xf32>
    %c0_3 = arith.constant 0 : index
    %c0_4 = arith.constant 0 : index
    %3 = vector.load %arg3[%c0_3, %c0_4] : memref<1x128xf32, #tpu.memory_space<vmem>>, vector<1x128xf32>
    %4 = vector.broadcast %3 : vector<1x128xf32> to vector<4x128xf32>
    %5 = arith.addf %2, %4 : vector<4x128xf32>
    %cst_5 = arith.constant 0.000000e+00 : f32
    %6 = vector.broadcast %cst_5 : f32 to vector<4x128xf32>
    %7 = arith.maximumf %5, %6 : vector<4x128xf32>
    %c0_6 = arith.constant 0 : index
    %c0_7 = arith.constant 0 : index
    %8 = vector.load %arg4[%c0_6, %c0_7] : memref<128x2xf32, #tpu.memory_space<vmem>>, vector<128x2xf32>
    %cst_8 = arith.constant dense<0.000000e+00> : vector<4x2xf32>
    %9 = tpu.matmul %7, %8, %cst_8 {dimension_numbers = #tpu.dot_dimension_numbers<[1], [0], [0], [1], [0, 0, 1, 1], [], []>} : vector<4x128xf32>, vector<128x2xf32>, vector<4x2xf32> -> vector<4x2xf32>
    %c0_9 = arith.constant 0 : index
    %c0_10 = arith.constant 0 : index
    %10 = vector.load %arg5[%c0_9, %c0_10] : memref<1x2xf32, #tpu.memory_space<vmem>>, vector<1x2xf32>
    %11 = vector.broadcast %10 : vector<1x2xf32> to vector<4x2xf32>
    %12 = arith.addf %9, %11 : vector<4x2xf32>
    %c0_11 = arith.constant 0 : index
    %c0_12 = arith.constant 0 : index
    %13 = vector.load %arg6[%c0_11, %c0_12] : memref<4x2xf32, #tpu.memory_space<vmem>>, vector<4x2xf32>
    tpu.vector_store %arg6[%c0_11, %c0_12], %12 {strides = array<i32>} : memref<4x2xf32, #tpu.memory_space<vmem>>, vector<4x2xf32>,
    return
  }
  func.func @transform_0(%arg0: i32) -> (i32, i32) {
    %c0_i32 = arith.constant 0 : i32
    %c0_i32_0 = arith.constant 0 : i32
    return %arg0, %c0_i32 : i32, i32
  }
  func.func @transform_1(%arg0: i32) -> (i32, i32) {
    %c0_i32 = arith.constant 0 : i32
    %c0_i32_0 = arith.constant 0 : i32
    %c0_i32_1 = arith.constant 0 : i32
    return %c0_i32, %c0_i32_0 : i32, i32
  }
  func.func @transform_2(%arg0: i32) -> (i32, i32) {
    %c0_i32 = arith.constant 0 : i32
    %c0_i32_0 = arith.constant 0 : i32
    %c0_i32_1 = arith.constant 0 : i32
    return %c0_i32, %c0_i32_0 : i32, i32
  }
  func.func @transform_3(%arg0: i32) -> (i32, i32) {
    %c0_i32 = arith.constant 0 : i32
    %c0_i32_0 = arith.constant 0 : i32
    %c0_i32_1 = arith.constant 0 : i32
    return %c0_i32, %c0_i32_0 : i32, i32
  }
  func.func @transform_4(%arg0: i32) -> (i32, i32) {
    %c0_i32 = arith.constant 0 : i32
    %c0_i32_0 = arith.constant 0 : i32
    %c0_i32_1 = arith.constant 0 : i32
    return %c0_i32, %c0_i32_0 : i32, i32
  }
  func.func @transform_5(%arg0: i32) -> (i32, i32) {
    %c0_i32 = arith.constant 0 : i32
    %c0_i32_0 = arith.constant 0 : i32
    return %arg0, %c0_i32 : i32, i32
  }
}

</mosaic_0001>

<llo_original>
// kernel: tpu_custom_call.1
$region0: #{tpu_custom_call.1}
  #allocation0 [shape = 'u32[]', space=smem, size = 0x4, offset = 0x4, fixed_abs, tag = 'smem constant byte address 0x4 - core index']
  #allocation1 [shape = 'u32[144,128]{1,0:T(1,128)}', space=vmem, size = 0x12000, scoped, tag = 'internal scratch']
  %s0 = inlined_call_operand.vmem [shape: f32[4,32], index: 0, kind: input, shape index: {}]
  %s1 = inlined_call_operand.vmem [shape: f32[32,128], index: 1, kind: input, shape index: {}]
  %s2 = inlined_call_operand.vmem [shape: f32[1,128], index: 2, kind: input, shape index: {}]
  %s3 = inlined_call_operand.vmem [shape: f32[128,2], index: 3, kind: input, shape index: {}]
  %s4 = inlined_call_operand.vmem [shape: f32[1,2], index: 4, kind: input, shape index: {}]
  %s5 = inlined_call_operand.vmem [shape: f32[4,2], index: 5, kind: output, shape index: {}]
  %s6 = sld [smem:[#allocation0]]
  $region30: #{tpu_custom_call.1} parent=0
    _
  %s8 = ssub.s32 1, %s6
  %s9 = scalar_select 0, %s8, %s6
  // Predicated region
  $region2: #{tpu_custom_call.1} parent=0 // pred_check
    _
  $region3: #{tpu_custom_call.1} parent=0 // pred_check_branch
    %11 = sbr.rel (0) target = $region5
  $region4: #{tpu_custom_call.1} parent=0 // pred_region
    _
  $region5: #{tpu_custom_call.1} parent=0 // pred_fallthru
    _
  // Predicated region
  $region6: #{tpu_custom_call.1} parent=0 // pred_check
    _
  $region7: #{tpu_custom_call.1} parent=0 // pred_check_branch
    %13 = sbr.rel (0) target = $region9
  $region8: #{tpu_custom_call.1} parent=0 // pred_region
    _
  $region9: #{tpu_custom_call.1} parent=0 // pred_fallthru
    _
  // Predicated region
  $region10: #{tpu_custom_call.1} parent=0 // pred_check
    _
  $region11: #{tpu_custom_call.1} parent=0 // pred_check_branch
    %15 = sbr.rel (0) target = $region13
  $region12: #{tpu_custom_call.1} parent=0 // pred_region
    _
  $region13: #{tpu_custom_call.1} parent=0 // pred_fallthru
    _
  // Predicated region
  $region14: #{tpu_custom_call.1} parent=0 // pred_check
    _
  $region15: #{tpu_custom_call.1} parent=0 // pred_check_branch
    %17 = sbr.rel (0) target = $region17
  $region16: #{tpu_custom_call.1} parent=0 // pred_region
    _
  $region17: #{tpu_custom_call.1} parent=0 // pred_fallthru
    _
  // Predicated region
  $region18: #{tpu_custom_call.1} parent=0 // pred_check
    _
  $region19: #{tpu_custom_call.1} parent=0 // pred_check_branch
    %19 = sbr.rel (0) target = $region21
  $region20: #{tpu_custom_call.1} parent=0 // pred_region
    _
  $region21: #{tpu_custom_call.1} parent=0 // pred_fallthru
    _
  %v20 = vld [vmem:[%s0] sm:$0xf]
  %v21 = vld [vmem:[%s1] sm:$0xff]
  %v22 = vld [vmem:[%s1 + $0x8] sm:$0xff]
  %v23 = vld [vmem:[%s1 + $0x10] sm:$0xff]
  %v24 = vld [vmem:[%s1 + $0x18] sm:$0xff]
  %v25 = vld [vmem:[%s2] sm:$0x1]
  %v27 = vlaneseq
  %v28 = vshrl.u32 %v27, 7
  %v29 = vsub.s32 0, %v28
  %v30 = vrot.slane %v25, %v29
  %vm32 = vcmask 261120
  %v34 = vsel %vm32, %v20, 0
  %36 = vmatprep.subr.mxu0 0.0
  %37 = vmatpush1.msra.mxu0 %v21
  %38 = vmatprep.subr.mxu0 0.0
  %39 = vmatpush1.msra.mxu0 %v22
  %40 = vmatprep.subr.mxu0 0.0
  %41 = vmatpush1.msra.mxu0 %v23
  %42 = vmatprep.subr.mxu0 0.0
  %43 = vmatpush1.msra.mxu0 %v24
  %44 = vmatprep.subr.mxu0 0.0
  %45 = vmatpush1.msra.mxu0 0.0
  %46 = vmatprep.subr.mxu0 0.0
  %47 = vmatpush1.msra.mxu0 0.0
  %48 = vmatprep.subr.mxu0 0.0
  %49 = vmatpush1.msra.mxu0 0.0
  %50 = vmatprep.subr.mxu0 0.0
  %51 = vmatpush1.msra.mxu0 0.0
  %52 = vmatprep.subr.mxu0 0.0
  %53 = vmatpush1.msra.mxu0 0.0
  %54 = vmatprep.subr.mxu0 0.0
  %55 = vmatpush1.msra.mxu0 0.0
  %56 = vmatprep.subr.mxu0 0.0
  %57 = vmatpush1.msra.mxu0 0.0
  %58 = vmatprep.subr.mxu0 0.0
  %59 = vmatpush1.msra.mxu0 0.0
  %60 = vmatprep.subr.mxu0 0.0
  %61 = vmatpush1.msra.mxu0 0.0
  %62 = vmatprep.subr.mxu0 0.0
  %63 = vmatpush1.msra.mxu0 0.0
  %64 = vmatprep.subr.mxu0 0.0
  %65 = vmatpush1.msra.mxu0 0.0
  %66 = vmatprep.subr.mxu0 0.0
  %67 = vmatpush1.msra.mxu0 0.0
  %68 = vmatprep.subr.mxu0 0.0
  %69 = vmatpush1.msra.mxu0 0.0
  %70 = vmatprep.subr.mxu0 0.0
  %71 = vmatpush1.msra.mxu0 0.0
  %72 = vmatprep.subr.mxu0 0.0
  %73 = vmatpush1.msra.mxu0 0.0
  %74 = vmatprep.subr.mxu0 0.0
  %75 = vmatpush1.msra.mxu0 0.0
  %76 = vmatprep.subr.mxu0 0.0
  %77 = vmatpush1.msra.mxu0 0.0
  %78 = vmatprep.subr.mxu0 0.0
  %79 = vmatpush1.msra.mxu0 0.0
  %80 = vmatprep.subr.mxu0 0.0
  %81 = vmatpush1.msra.mxu0 0.0
  %82 = vmatprep.subr.mxu0 0.0
  %83 = vmatpush1.msra.mxu0 0.0
  %84 = vmatprep.subr.mxu0 0.0
  %85 = vmatpush1.msra.mxu0 0.0
  %86 = vmatprep.subr.mxu0 0.0
  %87 = vmatpush1.msra.mxu0 0.0
  %88 = vmatprep.subr.mxu0 0.0
  %89 = vmatpush1.msra.mxu0 0.0
  %90 = vmatprep.subr.mxu0 0.0
  %91 = vmatpush1.msra.mxu0 0.0
  %92 = vmatprep.subr.mxu0 0.0
  %93 = vmatpush1.msra.mxu0 0.0
  %94 = vmatprep.subr.mxu0 0.0
  %95 = vmatpush1.msra.mxu0 0.0
  %96 = vmatprep.subr.mxu0 0.0
  %97 = vmatpush1.msra.mxu0 0.0
  %98 = vmatprep.subr.mxu0 0.0
  %99 = vmatpush1.msra.mxu0 0.0
  %100 = vmatprep.mubr.f32.mxu0 0.0
  %101 = vmatmul.mubr.f32.gmra.mrb[0].mxu0 %v34
  %v102 = vpop.f32.mrb[0].mxu0
  %v103 = vadd.f32 %v30, %v102
  %v104 = vpop.f32.mrb[0].mxu0
  %105 = vdwg.mxu0
  %v106 = vmax.f32 %v103, 0.0
  %v107 = vld [vmem:[%s3] sm:$0xff]
  %v108 = vld [vmem:[%s3 + $0x8] sm:$0xff]
  %v109 = vld [vmem:[%s3 + $0x10] sm:$0xff]
  %v110 = vld [vmem:[%s3 + $0x18] sm:$0xff]
  %v111 = vld [vmem:[%s3 + $0x20] sm:$0xff]
  %v112 = vld [vmem:[%s3 + $0x28] sm:$0xff]
  %v113 = vld [vmem:[%s3 + $0x30] sm:$0xff]
  %v114 = vld [vmem:[%s3 + $0x38] sm:$0xff]
  %v115 = vld [vmem:[%s3 + $0x40] sm:$0xff]
  %v116 = vld [vmem:[%s3 + $0x48] sm:$0xff]
  %v117 = vld [vmem:[%s3 + $0x50] sm:$0xff]
  %v118 = vld [vmem:[%s3 + $0x58] sm:$0xff]
  %v119 = vld [vmem:[%s3 + $0x60] sm:$0xff]
  %v120 = vld [vmem:[%s3 + $0x68] sm:$0xff]
  %v121 = vld [vmem:[%s3 + $0x70] sm:$0xff]
  %v122 = vld [vmem:[%s3 + $0x78] sm:$0xff]
  %v123 = vld [vmem:[%s4] sm:$0x1]
  %v125 = vlaneseq
  %v126 = vshrl.u32 %v125, 7
  %v127 = vsub.s32 0, %v126
  %v128 = vrot.slane %v123, %v127
  %130 = vmatprep.subr.mxu0 0.0
  %131 = vmatpush1.msra.mxu0 %v107
  %132 = vmatprep.subr.mxu0 0.0
  %133 = vmatpush1.msra.mxu0 %v108
  %134 = vmatprep.subr.mxu0 0.0
  %135 = vmatpush1.msra.mxu0 %v109
  %136 = vmatprep.subr.mxu0 0.0
  %137 = vmatpush1.msra.mxu0 %v110
  %138 = vmatprep.subr.mxu0 0.0
  %139 = vmatpush1.msra.mxu0 %v111
  %140 = vmatprep.subr.mxu0 0.0
  %141 = vmatpush1.msra.mxu0 %v112
  %142 = vmatprep.subr.mxu0 0.0
  %143 = vmatpush1.msra.mxu0 %v113
  %144 = vmatprep.subr.mxu0 0.0
  %145 = vmatpush1.msra.mxu0 %v114
  %146 = vmatprep.subr.mxu0 0.0
  %147 = vmatpush1.msra.mxu0 %v115
  %148 = vmatprep.subr.mxu0 0.0
  %149 = vmatpush1.msra.mxu0 %v116
  %150 = vmatprep.subr.mxu0 0.0
  %151 = vmatpush1.msra.mxu0 %v117
  %152 = vmatprep.subr.mxu0 0.0
  %153 = vmatpush1.msra.mxu0 %v118
  %154 = vmatprep.subr.mxu0 0.0
  %155 = vmatpush1.msra.mxu0 %v119
  %156 = vmatprep.subr.mxu0 0.0
  %157 = vmatpush1.msra.mxu0 %v120
  %158 = vmatprep.subr.mxu0 0.0
  %159 = vmatpush1.msra.mxu0 %v121
  %160 = vmatprep.subr.mxu0 0.0
  %161 = vmatpush1.msra.mxu0 %v122
  %162 = vmatprep.subr.mxu0 0.0
  %163 = vmatpush1.msra.mxu0 0.0
  %164 = vmatprep.subr.mxu0 0.0
  %165 = vmatpush1.msra.mxu0 0.0
  %166 = vmatprep.subr.mxu0 0.0
  %167 = vmatpush1.msra.mxu0 0.0
  %168 = vmatprep.subr.mxu0 0.0
  %169 = vmatpush1.msra.mxu0 0.0
  %170 = vmatprep.subr.mxu0 0.0
  %171 = vmatpush1.msra.mxu0 0.0
  %172 = vmatprep.subr.mxu0 0.0
  %173 = vmatpush1.msra.mxu0 0.0
  %174 = vmatprep.subr.mxu0 0.0
  %175 = vmatpush1.msra.mxu0 0.0
  %176 = vmatprep.subr.mxu0 0.0
  %177 = vmatpush1.msra.mxu0 0.0
  %178 = vmatprep.subr.mxu0 0.0
  %179 = vmatpush1.msra.mxu0 0.0
  %180 = vmatprep.subr.mxu0 0.0
  %181 = vmatpush1.msra.mxu0 0.0
  %182 = vmatprep.subr.mxu0 0.0
  %183 = vmatpush1.msra.mxu0 0.0
  %184 = vmatprep.subr.mxu0 0.0
  %185 = vmatpush1.msra.mxu0 0.0
  %186 = vmatprep.subr.mxu0 0.0
  %187 = vmatpush1.msra.mxu0 0.0
  %188 = vmatprep.subr.mxu0 0.0
  %189 = vmatpush1.msra.mxu0 0.0
  %190 = vmatprep.subr.mxu0 0.0
  %191 = vmatpush1.msra.mxu0 0.0
  %192 = vmatprep.subr.mxu0 0.0
  %193 = vmatpush1.msra.mxu0 0.0
  %194 = vmatprep.mubr.f32.mxu0 0.0
  %195 = vmatmul.mubr.f32.gmra.mrb[0].mxu0 %v106
  %v196 = vpop.f32.mrb[0].mxu0
  %v197 = vadd.f32 %v128, %v196
  %v198 = vpop.f32.mrb[0].mxu0
  %199 = vdwg.mxu0
  %vm200 = vcmask 11264
  %201 = vst.msk [vmem:[%s5] sm:$0xf] %vm200, %v197
  // Predicated region
  $region22: #{tpu_custom_call.1} parent=0 // pred_check
    _
  $region23: #{tpu_custom_call.1} parent=0 // pred_check_branch
    %203 = sbr.rel (0) target = $region25
  $region24: #{tpu_custom_call.1} parent=0 // pred_region
    _
  $region25: #{tpu_custom_call.1} parent=0 // pred_fallthru
    _
  // Predicated region
  $region26: #{tpu_custom_call.1} parent=0 // pred_check
    _
  $region27: #{tpu_custom_call.1} parent=0 // pred_check_branch
    %205 = sbr.rel (0) target = $region29
  $region28: #{tpu_custom_call.1} parent=0 // pred_region
    _
  $region29: #{tpu_custom_call.1} parent=0 // pred_fallthru
    _

</llo_original>
